<compile_context>
chip_gen: v5e
topology: v5e:2x2
jax: 0.10.0
libtpu: 0.0.40
codegen_flags: <defaults>
</compile_context>

<pallas_src>
import functools

import jax
import jax.numpy as jnp
from jax.experimental import pallas as pl
from jax.experimental.pallas import tpu as pltpu

_LANE = 128


def _cdiv(a, b):
    return (a + b - 1) // b


def _sublane_pack(itemsize):
    # f32 -> 8 sublanes per packed tile, bf16 -> 16, int8/fp8 -> 32.
    return 8 * max(1, 4 // max(1, itemsize))


def _padded_slab_bytes(h, w, itemsize):
    """Actual VMEM bytes of one (h, w) slab after (sublane, lane) padding."""
    sub = _sublane_pack(itemsize)
    hp = _cdiv(h, sub) * sub
    wp = _cdiv(w, _LANE) * _LANE
    return hp * wp * itemsize


def _vmem_capacity_bytes():
    try:
        return int(pltpu.get_tpu_info().vmem_capacity_bytes)
    except Exception:
        return 64 << 20  # conservative (v7x-sized) fallback


def _pick_slab_batch(nc, h, w, wo, itemsize):
    """Choose the per-step slab batch B and return (B, per_slab_bytes, vmem_cap).

    per_slab_bytes is the double-buffered (in + out) padded VMEM footprint of
    one (h, w)/(h, wo) slab pair.
    """
    vmem_cap = _vmem_capacity_bytes()
    if vmem_cap <= (64 << 20):
        # v7x-class: 64 MiB/TC, 2 TensorCores -> several steps per core so
        # step i+1's input DMA overlaps step i's output DMA.
        budget = 40 << 20
        min_grid_steps = 8
    else:
        # v5e/v6e: 128 MiB VMEM, single TC -> a few steps for DMA overlap.
        budget = 80 << 20
        min_grid_steps = 4

    per_slab = 2 * (_padded_slab_bytes(h, w, itemsize)
                    + _padded_slab_bytes(h, wo, itemsize))
    b_vmem = max(1, budget // per_slab)
    b_cap = max(1, min(b_vmem, _cdiv(nc, min_grid_steps), nc))

    # Prefer a divisor of nc near b_cap (no padded slabs); otherwise keep
    # b_cap and let the wrapper pad NC up to a multiple of it.
    for b in range(b_cap, max(1, b_cap // 2) - 1, -1):
        if nc % b == 0:
            return b, per_slab, vmem_cap
    return b_cap, per_slab, vmem_cap


def _lr_pad_kernel(x_ref, o_ref, *, padding, W):
    # x_ref: (B, H, W) VMEM tile; o_ref: (B, H, W + 2*padding) VMEM tile.
    # Build the full Wo-wide row in registers and issue a single store
    # (avoids 3 masked vst's per vreg row when W << 128).
    left = x_ref[:, :, W - padding:]   # wrap-around from the right edge
    right = x_ref[:, :, :padding]      # wrap-around from the left edge
    o_ref[...] = jnp.concatenate([left, x_ref[...], right], axis=-1)


def lr_pad_pallas(x, padding=1):
    """Pallas equivalent of torch.cat([x[..., -p:], x, x[..., :p]], dim=3)."""
    N, C, H, W = x.shape
    if padding == 0:
        return x
    if not (0 < padding <= W):
        raise ValueError(f"padding must be in (0, W={W}], got {padding}")

    Wo = W + 2 * padding
    NC = N * C
    xf = x.reshape(NC, H, W)
    itemsize = jnp.dtype(x.dtype).itemsize

    B, per_slab, vmem_cap = _pick_slab_batch(NC, H, W, Wo, itemsize)
    steps = _cdiv(NC, B)
    NCp = steps * B
    if NCp != NC:
        # Pad the leading (N*C) axis so B stays at its VMEM-optimal size even
        # for prime / awkward NC; the pad is bounded by < one slab batch.
        xf = jnp.pad(xf, ((0, NCp - NC), (0, 0), (0, 0)))

    # Scoped-VMEM limit: actual double-buffered tile footprint plus headroom,
    # capped below the physical capacity of the current chip generation.
    tile_bytes = B * per_slab
    vmem_limit = int(min(vmem_cap - (12 << 20),
                         max(32 << 20, tile_bytes + (8 << 20))))
    vmem_limit = max(vmem_limit, 16 << 20)

    out = pl.pallas_call(
        functools.partial(_lr_pad_kernel, padding=padding, W=W),
        out_shape=jax.ShapeDtypeStruct((NCp, H, Wo), x.dtype),
        grid=(steps,),
        in_specs=[pl.BlockSpec((B, H, W), lambda i: (i, 0, 0))],
        out_specs=pl.BlockSpec((B, H, Wo), lambda i: (i, 0, 0)),
        compiler_params=pltpu.CompilerParams(
            dimension_semantics=("parallel",),
            vmem_limit_bytes=vmem_limit,
        ),
    )(xf)

    if NCp != NC:
        out = out[:NC]
    return out.reshape(N, C, H, Wo)


def lr_pad_ref(x, padding=1):
    # Pure-JAX reference matching the PyTorch semantics.
    if padding == 0:
        return x
    return jnp.concatenate([x[..., -padding:], x, x[..., :padding]], axis=-1)


if __name__ == "__main__":
    key = jax.random.PRNGKey(0)
    # Small NCHW input consistent with the module's conv-style usage.
    x = jax.random.normal(key, (2, 4, 16, 16), dtype=jnp.float32)

    # Primary case: EquiBottleneck_semi calls lr_pad(out) with padding=1
    # before the 3x3 DeformConvPack.
    y = jax.block_until_ready(lr_pad_pallas(x, padding=1))
    assert y.shape == (2, 4, 16, 18), y.shape
    assert jnp.array_equal(y, lr_pad_ref(x, padding=1)), "padding=1 mismatch"

    # Wider halo: exercises a different halo width.
    y3 = jax.block_until_ready(lr_pad_pallas(x, padding=3))
    assert jnp.array_equal(y3, lr_pad_ref(x, padding=3)), "padding=3 mismatch"

    # Awkward channel count (prime NC) exercises the pad-NC-up path.
    x2 = jax.random.normal(jax.random.PRNGKey(1), (1, 7, 16, 16), jnp.float32)
    y2 = jax.block_until_ready(lr_pad_pallas(x2, padding=1))
    assert jnp.array_equal(y2, lr_pad_ref(x2, padding=1)), "prime-NC mismatch"

    # padding=0 short-circuit.
    y0 = lr_pad_pallas(x, padding=0)
    assert jnp.array_equal(y0, x), "padding=0 mismatch"

    print("KERNEL_OK")
</pallas_src>

<mosaic_0001>
module attributes {stable_mosaic.version = 11 : i64} {
  func.func @_lr_pad_kernel(%arg0: i32, %arg1: memref<1x16x16xf32, #tpu.memory_space<vmem>>, %arg2: memref<1x16x18xf32, #tpu.memory_space<vmem>>) attributes {dimension_semantics = [#tpu.dimension_semantics<parallel>], iteration_bounds = array<i64: 8>, scalar_prefetch = 0 : i64, scratch_operands = 0 : i64, tpu.core_type = #tpu.core_type<tc>, window_params = [{transform_indices = @transform_0, window_bounds = array<i64: 1, 16, 16>}, {transform_indices = @transform_1, window_bounds = array<i64: 1, 16, 18>}]} {
    %c0 = arith.constant 0 : index
    %c0_0 = arith.constant 0 : index
    %c15 = arith.constant 15 : index
    %0 = vector.load %arg1[%c0, %c0_0, %c15] : memref<1x16x16xf32, #tpu.memory_space<vmem>>, vector<1x16x1xf32>
    %c0_1 = arith.constant 0 : index
    %c0_2 = arith.constant 0 : index
    %c0_3 = arith.constant 0 : index
    %1 = vector.load %arg1[%c0_1, %c0_2, %c0_3] : memref<1x16x16xf32, #tpu.memory_space<vmem>>, vector<1x16x1xf32>
    %c0_4 = arith.constant 0 : index
    %c0_5 = arith.constant 0 : index
    %c0_6 = arith.constant 0 : index
    %2 = vector.load %arg1[%c0_4, %c0_5, %c0_6] : memref<1x16x16xf32, #tpu.memory_space<vmem>>, vector<1x16x16xf32>
    %3 = tpu.concatenate %0, %2, %1 in 2 : vector<1x16x1xf32>, vector<1x16x16xf32>, vector<1x16x1xf32> -> vector<1x16x18xf32>
    %c0_7 = arith.constant 0 : index
    %c0_8 = arith.constant 0 : index
    %c0_9 = arith.constant 0 : index
    %4 = vector.load %arg2[%c0_7, %c0_8, %c0_9] : memref<1x16x18xf32, #tpu.memory_space<vmem>>, vector<1x16x18xf32>
    tpu.vector_store %arg2[%c0_7, %c0_8, %c0_9], %3 {strides = array<i32>} : memref<1x16x18xf32, #tpu.memory_space<vmem>>, vector<1x16x18xf32>,
    return
  }
  func.func @transform_0(%arg0: i32) -> (i32, i32, i32) {
    %c0_i32 = arith.constant 0 : i32
    %c0_i32_0 = arith.constant 0 : i32
    %c0_i32_1 = arith.constant 0 : i32
    return %arg0, %c0_i32, %c0_i32_0 : i32, i32, i32
  }
  func.func @transform_1(%arg0: i32) -> (i32, i32, i32) {
    %c0_i32 = arith.constant 0 : i32
    %c0_i32_0 = arith.constant 0 : i32
    %c0_i32_1 = arith.constant 0 : i32
    return %arg0, %c0_i32, %c0_i32_0 : i32, i32, i32
  }
}

</mosaic_0001>

<llo_original>
// kernel: tpu_custom_call.1
$region0: #{tpu_custom_call.1}
  #allocation0 [shape = 'u32[]', space=smem, size = 0x4, offset = 0x4, fixed_abs, tag = 'smem constant byte address 0x4 - core index']
  #allocation1 [shape = 'u32[72,128]{1,0:T(1,128)}', space=vmem, size = 0x9000, scoped, tag = 'internal scratch']
  %s0 = inlined_call_operand.hbm [shape: f32[8,16,16], index: 0, kind: input, shape index: {}]
  %s1 = inlined_call_operand.hbm [shape: f32[8,16,18], index: 1, kind: output, shape index: {}]
  %s2 = sld [smem:[#allocation0]]
  $region41: #{tpu_custom_call.1} parent=0
    _
  %s4 = ssub.s32 1, %s2
  %s5 = scalar_select 0, %s4, %s2
  $region1: #{tpu_custom_call.1} parent=0
    #allocation2 [shape = 'u8[16384]{0}', space=vmem, size = 0x4000, scoped, tag = 'input window, operand 0']
    #allocation3 [shape = 's32[2]{0}', space=sflag, size = 0x8, scoped, tag = 'scoped memory for tpu_custom_call.1']
    #allocation4 [shape = 's32[2]{0}', space=sflag, size = 0x8, scoped, tag = 'scoped memory for tpu_custom_call.1']
    #allocation5 [shape = 'u8[16384]{0}', space=vmem, size = 0x4000, scoped, tag = 'output window, operand 0']
    %6 = vsyncpa [#allocation3], 0
    %s7 = scalar_lea.sflag [#allocation3], 1
    %8 = vsyncpa %s7, 0
    %9 = vsyncpa [#allocation4], 0
    %s10 = scalar_lea.sflag [#allocation4], 1
    %11 = vsyncpa %s10, 0
    loop: start=0, step=1, limit=10
    $region2: #{tpu_custom_call.1} parent=1 // loop_pre_header
      _
    $region3: #{tpu_custom_call.1} parent=1 // loop_header
      %s13 = sphi 0, %s17
      %p14 = scmp.ge.s32.totalorder %s13, 10
      %s23 = sphi 0, %s25
      %s26 = sphi 0, %s23
      %s27 = sphi 0, %s26
      %s43 = sphi 0, %s27
      %s49 = sphi 0, %s51
      %s52 = sphi 0, %s49
      %s53 = sphi 0, %s52
      %s69 = sphi 0, %s53
    $region4: #{tpu_custom_call.1} parent=1 // loop_header_branch
      %16 = sbr.rel (%p14) target = $region8
    $region5: #{tpu_custom_call.1} parent=1 // loop_body
      %s18 = ssub.s32 %s13, 1
      %s19 = ssub.s32 %s13, 2
      %s20 = sadd.s32 %s13, 1
      %s21 = ssub.s32 %s13, %s20
      %p22 = scmp.eq.s32.totalorder %s21, 0
      %s24 = sadd.s32 %s23, 1
      %s25 = scalar_select %p22, %s23, %s24
      %p28 = pneg %p22
      %p29 = scmp.eq.s32.totalorder %s13, 7
      %p30 = por %p28, %p29
      %p31 = scmp.ne.s32.totalorder %s23, %s26
      %p32 = scmp.eq.s32.totalorder %s13, 0
      %p33 = por %p31, %p32
      %p34 = scmp.ne.s32.totalorder %s23, %s26
      %p35 = scmp.eq.s32.totalorder %s18, 7
      %p36 = por %p34, %p35
      %p37 = scmp.ne.s32.totalorder %s26, %s27
      %p38 = scmp.eq.s32.totalorder %s18, 0
      %p39 = por %p37, %p38
      %p40 = scmp.ne.s32.totalorder %s26, %s27
      %p41 = scmp.eq.s32.totalorder %s19, 7
      %p42 = por %p40, %p41
      %p44 = scmp.ne.s32.totalorder %s27, %s43
      %p45 = scmp.eq.s32.totalorder %s19, 0
      %p46 = por %p44, %p45
      %s47 = ssub.s32 %s13, %s20
      %p48 = scmp.eq.s32.totalorder %s47, 0
      %s50 = sadd.s32 %s49, 1
      %s51 = scalar_select %p48, %s49, %s50
      %p54 = pneg %p48
      %p55 = scmp.eq.s32.totalorder %s13, 7
      %p56 = por %p54, %p55
      %p57 = scmp.ne.s32.totalorder %s49, %s52
      %p58 = scmp.eq.s32.totalorder %s13, 0
      %p59 = por %p57, %p58
      %p60 = scmp.ne.s32.totalorder %s49, %s52
      %p61 = scmp.eq.s32.totalorder %s18, 7
      %p62 = por %p60, %p61
      %p63 = scmp.ne.s32.totalorder %s52, %s53
      %p64 = scmp.eq.s32.totalorder %s18, 0
      %p65 = por %p63, %p64
      %p66 = scmp.ne.s32.totalorder %s52, %s53
      %p67 = scmp.eq.s32.totalorder %s19, 7
      %p68 = por %p66, %p67
      %p70 = scmp.ne.s32.totalorder %s53, %s69
      %p71 = scmp.eq.s32.totalorder %s19, 0
      %p72 = por %p70, %p71
      %p73 = scmp.le.s32.totalorder 1, %s13
      %p74 = scmp.lt.s32.totalorder %s13, 9
      %p75 = pnand %p73, %p74
      %p76 = pneg %p75
      // Predicated region
      $region9: #{tpu_custom_call.1} parent=5 // pred_check
        _
      $region10: #{tpu_custom_call.1} parent=5 // pred_check_branch
        %78 = sbr.rel (%p75) target = $region12
      $region11: #{tpu_custom_call.1} parent=5 // pred_region
        %s79 = ssub.s32 %s13, 1
      $region12: #{tpu_custom_call.1} parent=5 // pred_fallthru
        _
      %p80 = scmp.lt.s32.totalorder %s13, 8
      // Predicated region
      $region13: #{tpu_custom_call.1} parent=5 // pred_check
        %p81 = pneg %p80
      $region14: #{tpu_custom_call.1} parent=5 // pred_check_branch
        %83 = sbr.rel (%p81) target = $region16
      $region15: #{tpu_custom_call.1} parent=5 // pred_region
        // Predicated region
        $region17: #{tpu_custom_call.1} parent=15 // pred_check
          %p84 = pneg %p33
        $region18: #{tpu_custom_call.1} parent=15 // pred_check_branch
          %86 = sbr.rel (%p84) target = $region20
        $region19: #{tpu_custom_call.1} parent=15 // pred_region
          %s87 = sand.u32 %s23, 1
          %s88 = scalar_lea.sflag [#allocation3], %s87
          %s89 = sand.u32 %s23, 1
          %s90 = smul.addr %s89, 16
          %s91 = scalar_lea.vmem [#allocation2], %s90
          %93 = vsyncadd %s88, 0
          %s94 = smul.addr %s13, 2
          %s95 = smul.addr %s94, 8
          %s96 = scalar_lea.hbm %s0, %s95
          %s97 = sshll.u32 %s96, 4
          %s98 = int_to_ptr.hbm [resolvable:$true] %s97
          %s99 = sshll.u32 %s91, 4
          %s100 = int_to_ptr.vmem [resolvable:$true] %s99
          %105 = dma.hbm_to_vmem [thread:$0]  %s98, 256, %s100, %s88, 128, 128, 8
        $region20: #{tpu_custom_call.1} parent=15 // pred_fallthru
          _
      $region16: #{tpu_custom_call.1} parent=5 // pred_fallthru
        _
      %p106 = scmp.le.s32.totalorder 1, %s13
      %p107 = scmp.lt.s32.totalorder %s13, 9
      %p108 = pnand %p106, %p107
      %p109 = pneg %p108
      // Predicated region
      $region21: #{tpu_custom_call.1} parent=5 // pred_check
        _
      $region22: #{tpu_custom_call.1} parent=5 // pred_check_branch
        %111 = sbr.rel (%p108) target = $region24
      $region23: #{tpu_custom_call.1} parent=5 // pred_region
        %s112 = ssub.s32 %s13, 1
        %s113 = sand.u32 %s26, 1
        %s114 = scalar_lea.sflag [#allocation3], %s113
        %s115 = sand.u32 %s26, 1
        %s116 = smul.addr %s115, 16
        %s117 = scalar_lea.vmem [#allocation2], %s116
        // Predicated region
        $region25: #{tpu_custom_call.1} parent=23 // pred_check
          %p118 = pneg %p39
        $region26: #{tpu_custom_call.1} parent=23 // pred_check_branch
          %120 = sbr.rel (%p118) target = $region28
        $region27: #{tpu_custom_call.1} parent=23 // pred_region
          %122 = dma.done %s114, 256
        $region28: #{tpu_custom_call.1} parent=23 // pred_fallthru
          _
        %s123 = sand.u32 %s26, 1
        %s124 = scalar_lea.sflag [#allocation3], %s123
        %s125 = sand.u32 %s26, 1
        %s126 = smul.addr %s125, 16
        %s127 = scalar_lea.vmem [#allocation2], %s126
        %p128 = pneg %p39
        %p129 = pneg %p36
        %p130 = pneg %p65
        %p131 = pneg %p62
        %s132 = sand.u32 %s52, 1
        %s133 = scalar_lea.sflag [#allocation4], %s132
        %s134 = sand.u32 %s52, 1
        %s135 = smul.addr %s134, 16
        %s136 = scalar_lea.vmem [#allocation5], %s135
        %v137 = vld [vmem:[%s117] sm:$0xff]
        %v138 = vld [vmem:[%s117 + $0x8] sm:$0xff]
        %141 = vrot.lane.b32.xlu0 %v137, 113
        %v142 = vpop.permute.xlu0 %141
        %143 = vrot.lane.b32.xlu0 %v138, 113
        %v144 = vpop.permute.xlu0 %143
        %147 = vrot.lane.b32.xlu0 %v137, 1
        %v148 = vpop.permute.xlu0 %147
        %149 = vrot.lane.b32.xlu0 %v138, 1
        %v150 = vpop.permute.xlu0 %149
        %153 = vrot.lane.b32.xlu0 %v137, 17
        %v154 = vpop.permute.xlu0 %153
        %155 = vrot.lane.b32.xlu0 %v138, 17
        %v156 = vpop.permute.xlu0 %155
        %vm159 = vcmask 7168
        %v160 = vsel %vm159, %v142, %v148
        %v161 = vsel %vm159, %v144, %v150
        %vm162 = vcmask 138240
        %v163 = vsel %vm162, %v160, %v154
        %v164 = vsel %vm162, %v161, %v156
        %vm165 = vcmask 146432
        %166 = vst.msk [vmem:[%s136] sm:$0xff] %vm165, %v163
        %167 = vst.msk [vmem:[%s136 + $0x8] sm:$0xff] %vm165, %v164
        %s168 = sand.u32 %s52, 1
        %s169 = scalar_lea.sflag [#allocation4], %s168
        %s170 = sand.u32 %s52, 1
        %s171 = smul.addr %s170, 16
        %s172 = scalar_lea.vmem [#allocation5], %s171
        // Predicated region
        $region29: #{tpu_custom_call.1} parent=23 // pred_check
          %p173 = pneg %p62
        $region30: #{tpu_custom_call.1} parent=23 // pred_check_branch
          %175 = sbr.rel (%p173) target = $region32
        $region31: #{tpu_custom_call.1} parent=23 // pred_region
          %177 = vsyncadd %s169, 0
          %s178 = smul.addr %s18, 2
          %s179 = smul.addr %s178, 8
          %s180 = scalar_lea.hbm %s1, %s179
          %s181 = sshll.u32 %s172, 4
          %s182 = int_to_ptr.vmem [resolvable:$true] %s181
          %s183 = sshll.u32 %s180, 4
          %s184 = int_to_ptr.hbm [resolvable:$true] %s183
          %189 = dma.vmem_to_hbm [thread:$0]  %s182, 256, %s184, %s169, 128, 128, 8
        $region32: #{tpu_custom_call.1} parent=23 // pred_fallthru
          _
      $region24: #{tpu_custom_call.1} parent=5 // pred_fallthru
        _
      %p190 = scmp.le.s32.totalorder 2, %s13
      // Predicated region
      $region33: #{tpu_custom_call.1} parent=5 // pred_check
        %p191 = pneg %p190
      $region34: #{tpu_custom_call.1} parent=5 // pred_check_branch
        %193 = sbr.rel (%p191) target = $region36
      $region35: #{tpu_custom_call.1} parent=5 // pred_region
        %s194 = ssub.s32 %s13, 2
        // Predicated region
        $region37: #{tpu_custom_call.1} parent=35 // pred_check
          %p195 = pneg %p68
        $region38: #{tpu_custom_call.1} parent=35 // pred_check_branch
          %197 = sbr.rel (%p195) target = $region40
        $region39: #{tpu_custom_call.1} parent=35 // pred_region
          %s198 = sand.u32 %s53, 1
          %s199 = scalar_lea.sflag [#allocation4], %s198
          %s200 = sand.u32 %s53, 1
          %s201 = smul.addr %s200, 16
          %s202 = scalar_lea.vmem [#allocation5], %s201
          %204 = dma.done %s199, 256
        $region40: #{tpu_custom_call.1} parent=35 // pred_fallthru
          _
      $region36: #{tpu_custom_call.1} parent=5 // pred_fallthru
        _
    $region6: #{tpu_custom_call.1} parent=1 // loop_footer
      %s17 = sadd.s32 1, %s13
    $region7: #{tpu_custom_call.1} parent=1 // loop_footer_branch
      %12 = sbr.rel target = $region3
    $region8: #{tpu_custom_call.1} parent=1 // loop_exit
      _
    %205 = vsyncpa [#allocation3], 1
    %s206 = scalar_lea.sflag [#allocation3], 1
    %207 = vsyncpa %s206, 1
    %208 = vsyncpa [#allocation4], 1
    %s209 = scalar_lea.sflag [#allocation4], 1
    %210 = vsyncpa %s209, 1

</llo_original>
